<compile_context>
chip_gen: v7x
topology: tpu7x:2x2x1
jax: 0.10.0
libtpu: 0.0.40
codegen_flags: <defaults>
</compile_context>

<pallas_src>
import math
import functools

import jax
import jax.numpy as jnp
from jax import lax
from jax.experimental import pallas as pl
from jax.experimental.pallas import tpu as pltpu

_LANE = 128
_SUBLANE = 8


def _round_up(x, m):
    return ((x + m - 1) // m) * m


def _flash_qkv_kernel(h_ref, x_ref, wqT_ref, wkT_ref, bq_ref, bk_ref, out_ref,
                      q_sc, m_sc, l_sc, acc_sc, *, inv_sqrt_dk, Lk, tk):
    kv = pl.program_id(2)

    @pl.when(kv == 0)
    def _init():
        # Compute Q once per (batch, q-tile); keep it resident across Lk tiles.
        h = h_ref[0]                                          # (tq, Dp) native dtype
        q = jnp.dot(h, wqT_ref[...],
                    preferred_element_type=jnp.float32) + bq_ref[...]
        q_sc[...] = q * inv_sqrt_dk                           # fold 1/sqrt(dk) into Q
        m_sc[...] = jnp.full_like(m_sc, -jnp.inf)
        l_sc[...] = jnp.zeros_like(l_sc)
        acc_sc[...] = jnp.zeros_like(acc_sc)

    x = x_ref[0]                                              # (tk, Dp) native dtype
    k = jnp.dot(x, wkT_ref[...],
                preferred_element_type=jnp.float32) + bk_ref[...]   # (tk, dkp) f32

    # Scores: contract last axis of Q with last axis of K (no explicit .T).
    s = lax.dot_general(q_sc[...], k,
                        dimension_numbers=(((1,), (1,)), ((), ())),
                        preferred_element_type=jnp.float32)   # (tq, tk)

    # Mask padded key positions (keys beyond the true Lk).
    key_idx = kv * tk + lax.broadcasted_iota(jnp.int32, s.shape, 1)
    s = jnp.where(key_idx < Lk, s, -1e30)

    # Online softmax update.
    m_prev = m_sc[...]
    m_new = jnp.maximum(m_prev, jnp.max(s, axis=-1, keepdims=True))
    alpha = jnp.exp(m_prev - m_new)
    p = jnp.exp(s - m_new)
    l_sc[...] = alpha * l_sc[...] + jnp.sum(p, axis=-1, keepdims=True)
    acc_sc[...] = alpha * acc_sc[...] + jnp.dot(
        p.astype(x.dtype), x, preferred_element_type=jnp.float32)
    m_sc[...] = m_new

    @pl.when(kv == pl.num_programs(2) - 1)
    def _finalize():
        inv_l = pl.reciprocal(l_sc[...], approx=True)         # EUP vrcp, free slot
        out_ref[0] = (acc_sc[...] * inv_l).astype(out_ref.dtype)


def qkv_invi_based_attn(X, h, Wq, bq, Wk, bk, *, tq_target=512, tk_target=512):
    """X:(B,Lk,D)  h:(B,Lq,D)  Wq,Wk:(dk,D)  bq,bk:(dk,) -> (B,Lq,D)."""
    B, Lk, D = X.shape
    _, Lq, _ = h.shape
    dk = Wq.shape[0]
    dtype = X.dtype

    # Lane-dense padding of feature dims (multiples of 128).
    Dp = _round_up(D, _LANE)
    dkp = _round_up(dk, _LANE)

    # Tile sizes: multiples of the sublane count, capped for VMEM headroom
    # (tiles <=512 keep the per-step footprint a few MiB on all generations,
    # including v7x's 64 MiB VMEM).
    tq = min(tq_target, _round_up(Lq, _SUBLANE))
    tk = min(tk_target, _round_up(Lk, _SUBLANE))
    Lqp = _round_up(Lq, tq)
    Lkp = _round_up(Lk, tk)

    # Zero-pad activations (seq + feature). Padded feature columns contribute
    # nothing (weights padded with zeros); padded key rows are masked in-kernel;
    # padded query rows are sliced off below.
    h_p = jnp.zeros((B, Lqp, Dp), dtype).at[:, :Lq, :D].set(h.astype(dtype))
    x_p = jnp.zeros((B, Lkp, Dp), dtype).at[:, :Lk, :D].set(X)

    # Weights in the activation dtype (so MXU sees matched, possibly bf16,
    # operands); pre-transposed so the kernel does plain (L,Dp)@(Dp,dkp).
    WqT = jnp.zeros((Dp, dkp), dtype).at[:D, :dk].set(jnp.transpose(Wq).astype(dtype))
    WkT = jnp.zeros((Dp, dkp), dtype).at[:D, :dk].set(jnp.transpose(Wk).astype(dtype))
    # Biases stay f32: they are added to the f32 accumulator output.
    bq2 = jnp.zeros((1, dkp), jnp.float32).at[:, :dk].set(
        bq.reshape(1, dk).astype(jnp.float32))
    bk2 = jnp.zeros((1, dkp), jnp.float32).at[:, :dk].set(
        bk.reshape(1, dk).astype(jnp.float32))

    kernel = functools.partial(_flash_qkv_kernel,
                               inv_sqrt_dk=1.0 / math.sqrt(dk), Lk=Lk, tk=tk)

    out_p = pl.pallas_call(
        kernel,
        out_shape=jax.ShapeDtypeStruct((B, Lqp, Dp), dtype),
        grid_spec=pltpu.PrefetchScalarGridSpec(
            num_scalar_prefetch=0,
            grid=(B, Lqp // tq, Lkp // tk),
            in_specs=[
                pl.BlockSpec((1, tq, Dp), lambda b, qi, ki: (b, qi, 0)),   # h
                pl.BlockSpec((1, tk, Dp), lambda b, qi, ki: (b, ki, 0)),   # X
                pl.BlockSpec((Dp, dkp), lambda b, qi, ki: (0, 0)),         # Wq^T
                pl.BlockSpec((Dp, dkp), lambda b, qi, ki: (0, 0)),         # Wk^T
                pl.BlockSpec((1, dkp), lambda b, qi, ki: (0, 0)),          # bq
                pl.BlockSpec((1, dkp), lambda b, qi, ki: (0, 0)),          # bk
            ],
            out_specs=pl.BlockSpec((1, tq, Dp), lambda b, qi, ki: (b, qi, 0)),
            scratch_shapes=[
                pltpu.VMEM((tq, dkp), jnp.float32),   # cached, pre-scaled Q
                pltpu.VMEM((tq, 1), jnp.float32),     # running max m
                pltpu.VMEM((tq, 1), jnp.float32),     # running sum l
                pltpu.VMEM((tq, Dp), jnp.float32),    # output accumulator
            ],
        ),
        compiler_params=pltpu.CompilerParams(
            dimension_semantics=("parallel", "parallel", "arbitrary")),
    )(h_p, x_p, WqT, WkT, bq2, bk2)

    return out_p[:, :Lq, :D]


def _reference(X, h, Wq, bq, Wk, bk):
    dk = Wq.shape[0]
    Q = jnp.einsum("bqd,kd->bqk", h, Wq) + bq
    K = jnp.einsum("bld,kd->blk", X, Wk) + bk
    S = jnp.einsum("bqk,blk->bql", Q, K) / math.sqrt(dk)
    A = jax.nn.softmax(S, axis=2)
    return jnp.einsum("bql,bld->bqd", A, X)


if __name__ == "__main__":
    # Small shapes consistent with the module's forward.
    B, Lq, Lk = 2, 8, 8
    input_size, dk = 32, 16

    key = jax.random.PRNGKey(0)
    kx, kh, kwq, kbq, kwk, kbk = jax.random.split(key, 6)

    X = jax.random.normal(kx, (B, Lk, input_size), dtype=jnp.float32)
    h = jax.random.normal(kh, (B, Lq, input_size), dtype=jnp.float32)

    # Deterministic nn.Linear-style init: U(-1/sqrt(fan_in), 1/sqrt(fan_in)).
    bound = 1.0 / math.sqrt(input_size)
    Wq = jax.random.uniform(kwq, (dk, input_size), minval=-bound, maxval=bound,
                            dtype=jnp.float32)
    bq = jax.random.uniform(kbq, (dk,), minval=-bound, maxval=bound,
                            dtype=jnp.float32)
    Wk = jax.random.uniform(kwk, (dk, input_size), minval=-bound, maxval=bound,
                            dtype=jnp.float32)
    bk = jax.random.uniform(kbk, (dk,), minval=-bound, maxval=bound,
                            dtype=jnp.float32)

    out = qkv_invi_based_attn(X, h, Wq, bq, Wk, bk)
    out = jax.block_until_ready(out)

    ref = _reference(X, h, Wq, bq, Wk, bk)
    assert out.shape == (B, Lq, input_size)
    # Tolerance loosened slightly vs f32 reference because of the approximate
    # (EUP) reciprocal in the softmax normalization.
    assert jnp.allclose(out, ref, atol=2e-2, rtol=2e-2), "mismatch vs reference"

    print("KERNEL_OK")
</pallas_src>

<mosaic_0001>
module attributes {stable_mosaic.version = 11 : i64} {
  func.func @_flash_qkv_kernel(%arg0: i32, %arg1: i32, %arg2: i32, %arg3: memref<1x8x128xf32, #tpu.memory_space<vmem>>, %arg4: memref<1x8x128xf32, #tpu.memory_space<vmem>>, %arg5: memref<128x128xf32, #tpu.memory_space<vmem>>, %arg6: memref<128x128xf32, #tpu.memory_space<vmem>>, %arg7: memref<1x128xf32, #tpu.memory_space<vmem>>, %arg8: memref<1x128xf32, #tpu.memory_space<vmem>>, %arg9: memref<1x8x128xf32, #tpu.memory_space<vmem>>, %arg10: memref<8x128xf32, #tpu.memory_space<vmem>>, %arg11: memref<8x1xf32, #tpu.memory_space<vmem>>, %arg12: memref<8x1xf32, #tpu.memory_space<vmem>>, %arg13: memref<8x128xf32, #tpu.memory_space<vmem>>) attributes {dimension_semantics = [#tpu.dimension_semantics<parallel>, #tpu.dimension_semantics<parallel>, #tpu.dimension_semantics<arbitrary>], iteration_bounds = array<i64: 2, 1, 1>, scalar_prefetch = 0 : i64, scratch_operands = 4 : i64, tpu.core_type = #tpu.core_type<tc>, window_params = [{transform_indices = @transform_0, window_bounds = array<i64: 1, 8, 128>}, {transform_indices = @transform_1, window_bounds = array<i64: 1, 8, 128>}, {pipeline_mode = #tpu.pipeline_mode<synchronous>, transform_indices = @transform_2, window_bounds = array<i64: 128, 128>}, {pipeline_mode = #tpu.pipeline_mode<synchronous>, transform_indices = @transform_3, window_bounds = array<i64: 128, 128>}, {pipeline_mode = #tpu.pipeline_mode<synchronous>, transform_indices = @transform_4, window_bounds = array<i64: 1, 128>}, {pipeline_mode = #tpu.pipeline_mode<synchronous>, transform_indices = @transform_5, window_bounds = array<i64: 1, 128>}, {transform_indices = @transform_6, window_bounds = array<i64: 1, 8, 128>}]} {
    %c0_i32 = arith.constant 0 : i32
    %0 = arith.cmpi eq, %arg2, %c0_i32 : i32
    %1 = arith.extui %0 : i1 to i32
    %c0_i32_0 = arith.constant 0 : i32
    %2 = arith.cmpi ne, %1, %c0_i32_0 : i32
    scf.if %2 {
      %c0_29 = arith.constant 0 : index
      %c0_30 = arith.constant 0 : index
      %c0_31 = arith.constant 0 : index
      %45 = vector.load %arg3[%c0_29, %c0_30, %c0_31] : memref<1x8x128xf32, #tpu.memory_space<vmem>>, vector<1x8x128xf32>
      %46 = vector.shape_cast %45 : vector<1x8x128xf32> to vector<8x128xf32>
      %c0_32 = arith.constant 0 : index
      %c0_33 = arith.constant 0 : index
      %47 = vector.load %arg5[%c0_32, %c0_33] : memref<128x128xf32, #tpu.memory_space<vmem>>, vector<128x128xf32>
      %cst_34 = arith.constant dense<0.000000e+00> : vector<8x128xf32>
      %48 = tpu.matmul %46, %47, %cst_34 {dimension_numbers = #tpu.dot_dimension_numbers<[1], [0], [0], [1], [0, 0, 1, 1], [], []>} : vector<8x128xf32>, vector<128x128xf32>, vector<8x128xf32> -> vector<8x128xf32>
      %c0_35 = arith.constant 0 : index
      %c0_36 = arith.constant 0 : index
      %49 = vector.load %arg7[%c0_35, %c0_36] : memref<1x128xf32, #tpu.memory_space<vmem>>, vector<1x128xf32>
      %50 = vector.broadcast %49 : vector<1x128xf32> to vector<8x128xf32>
      %51 = arith.addf %48, %50 : vector<8x128xf32>
      %cst_37 = arith.constant 2.500000e-01 : f32
      %52 = vector.broadcast %cst_37 : f32 to vector<8x128xf32>
      %53 = arith.mulf %51, %52 : vector<8x128xf32>
      %c0_38 = arith.constant 0 : index
      %c0_39 = arith.constant 0 : index
      %54 = vector.load %arg10[%c0_38, %c0_39] : memref<8x128xf32, #tpu.memory_space<vmem>>, vector<8x128xf32>
      tpu.vector_store %arg10[%c0_38, %c0_39], %53 {strides = array<i32>} : memref<8x128xf32, #tpu.memory_space<vmem>>, vector<8x128xf32>,
      %cst_40 = arith.constant 0xFF800000 : f32
      %55 = vector.broadcast %cst_40 : f32 to vector<8x1xf32>
      %c0_41 = arith.constant 0 : index
      %c0_42 = arith.constant 0 : index
      %56 = vector.load %arg11[%c0_41, %c0_42] : memref<8x1xf32, #tpu.memory_space<vmem>>, vector<8x1xf32>
      tpu.vector_store %arg11[%c0_41, %c0_42], %55 {strides = array<i32>} : memref<8x1xf32, #tpu.memory_space<vmem>>, vector<8x1xf32>,
      %cst_43 = arith.constant 0.000000e+00 : f32
      %57 = vector.broadcast %cst_43 : f32 to vector<8x1xf32>
      %c0_44 = arith.constant 0 : index
      %c0_45 = arith.constant 0 : index
      %58 = vector.load %arg12[%c0_44, %c0_45] : memref<8x1xf32, #tpu.memory_space<vmem>>, vector<8x1xf32>
      tpu.vector_store %arg12[%c0_44, %c0_45], %57 {strides = array<i32>} : memref<8x1xf32, #tpu.memory_space<vmem>>, vector<8x1xf32>,
      %cst_46 = arith.constant 0.000000e+00 : f32
      %59 = vector.broadcast %cst_46 : f32 to vector<8x128xf32>
      %c0_47 = arith.constant 0 : index
      %c0_48 = arith.constant 0 : index
      %60 = vector.load %arg13[%c0_47, %c0_48] : memref<8x128xf32, #tpu.memory_space<vmem>>, vector<8x128xf32>
      tpu.vector_store %arg13[%c0_47, %c0_48], %59 {strides = array<i32>} : memref<8x128xf32, #tpu.memory_space<vmem>>, vector<8x128xf32>,
    } else {
    }
    %c0 = arith.constant 0 : index
    %c0_1 = arith.constant 0 : index
    %c0_2 = arith.constant 0 : index
    %3 = vector.load %arg4[%c0, %c0_1, %c0_2] : memref<1x8x128xf32, #tpu.memory_space<vmem>>, vector<1x8x128xf32>
    %4 = vector.shape_cast %3 : vector<1x8x128xf32> to vector<8x128xf32>
    %c0_3 = arith.constant 0 : index
    %c0_4 = arith.constant 0 : index
    %5 = vector.load %arg6[%c0_3, %c0_4] : memref<128x128xf32, #tpu.memory_space<vmem>>, vector<128x128xf32>
    %cst = arith.constant dense<0.000000e+00> : vector<8x128xf32>
    %6 = tpu.matmul %4, %5, %cst {dimension_numbers = #tpu.dot_dimension_numbers<[1], [0], [0], [1], [0, 0, 1, 1], [], []>} : vector<8x128xf32>, vector<128x128xf32>, vector<8x128xf32> -> vector<8x128xf32>
    %c0_5 = arith.constant 0 : index
    %c0_6 = arith.constant 0 : index
    %7 = vector.load %arg8[%c0_5, %c0_6] : memref<1x128xf32, #tpu.memory_space<vmem>>, vector<1x128xf32>
    %8 = vector.broadcast %7 : vector<1x128xf32> to vector<8x128xf32>
    %9 = arith.addf %6, %8 : vector<8x128xf32>
    %c0_7 = arith.constant 0 : index
    %c0_8 = arith.constant 0 : index
    %10 = vector.load %arg10[%c0_7, %c0_8] : memref<8x128xf32, #tpu.memory_space<vmem>>, vector<8x128xf32>
    %cst_9 = arith.constant dense<0.000000e+00> : vector<8x8xf32>
    %11 = tpu.matmul %10, %9, %cst_9 {dimension_numbers = #tpu.dot_dimension_numbers<[1], [1], [0], [0], [0, 0, 1, 0], [], []>} : vector<8x128xf32>, vector<8x128xf32>, vector<8x8xf32> -> vector<8x8xf32>
    %c8_i32 = arith.constant 8 : i32
    %12 = arith.muli %arg2, %c8_i32 : i32
    %13 = tpu.iota {dimensions = array<i32: 1>} : vector<8x8xi32>
    %14 = vector.broadcast %12 : i32 to vector<8x8xi32>
    %15 = arith.addi %14, %13 : vector<8x8xi32>
    %c8_i32_10 = arith.constant 8 : i32
    %16 = vector.broadcast %c8_i32_10 : i32 to vector<8x8xi32>
    %17 = arith.cmpi slt, %15, %16 : vector<8x8xi32>
    %cst_11 = arith.constant -1.000000e+30 : f32
    %18 = vector.broadcast %cst_11 : f32 to vector<8x8xf32>
    %19 = arith.select %17, %11, %18 : vector<8x8xi1>, vector<8x8xf32>
    %c0_12 = arith.constant 0 : index
    %c0_13 = arith.constant 0 : index
    %20 = vector.load %arg11[%c0_12, %c0_13] : memref<8x1xf32, #tpu.memory_space<vmem>>, vector<8x1xf32>
    %cst_14 = arith.constant dense<0xFF800000> : vector<8xf32>
    %21 = vector.multi_reduction <maximumf>, %19, %cst_14 [1] : vector<8x8xf32> to vector<8xf32>
    %22 = vector.shape_cast %21 : vector<8xf32> to vector<8x1xf32>
    %23 = arith.maximumf %20, %22 : vector<8x1xf32>
    %24 = arith.subf %20, %23 : vector<8x1xf32>
    %25 = math.exp %24 : vector<8x1xf32>
    %26 = vector.broadcast %23 : vector<8x1xf32> to vector<8x8xf32>
    %27 = arith.subf %19, %26 : vector<8x8xf32>
    %28 = math.exp %27 : vector<8x8xf32>
    %c0_15 = arith.constant 0 : index
    %c0_16 = arith.constant 0 : index
    %29 = vector.load %arg12[%c0_15, %c0_16] : memref<8x1xf32, #tpu.memory_space<vmem>>, vector<8x1xf32>
    %30 = arith.mulf %25, %29 : vector<8x1xf32>
    %cst_17 = arith.constant dense<0.000000e+00> : vector<8xf32>
    %31 = vector.multi_reduction <add>, %28, %cst_17 [1] : vector<8x8xf32> to vector<8xf32>
    %32 = vector.shape_cast %31 : vector<8xf32> to vector<8x1xf32>
    %33 = arith.addf %30, %32 : vector<8x1xf32>
    %c0_18 = arith.constant 0 : index
    %c0_19 = arith.constant 0 : index
    %34 = vector.load %arg12[%c0_18, %c0_19] : memref<8x1xf32, #tpu.memory_space<vmem>>, vector<8x1xf32>
    tpu.vector_store %arg12[%c0_18, %c0_19], %33 {strides = array<i32>} : memref<8x1xf32, #tpu.memory_space<vmem>>, vector<8x1xf32>,
    %c0_20 = arith.constant 0 : index
    %c0_21 = arith.constant 0 : index
    %35 = vector.load %arg13[%c0_20, %c0_21] : memref<8x128xf32, #tpu.memory_space<vmem>>, vector<8x128xf32>
    %36 = vector.broadcast %25 : vector<8x1xf32> to vector<8x128xf32>
    %37 = arith.mulf %36, %35 : vector<8x128xf32>
    %cst_22 = arith.constant dense<0.000000e+00> : vector<8x128xf32>
    %38 = tpu.matmul %28, %4, %cst_22 {dimension_numbers = #tpu.dot_dimension_numbers<[1], [0], [0], [1], [0, 0, 1, 1], [], []>} : vector<8x8xf32>, vector<8x128xf32>, vector<8x128xf32> -> vector<8x128xf32>
    %39 = arith.addf %37, %38 : vector<8x128xf32>
    %c0_23 = arith.constant 0 : index
    %c0_24 = arith.constant 0 : index
    %40 = vector.load %arg13[%c0_23, %c0_24] : memref<8x128xf32, #tpu.memory_space<vmem>>, vector<8x128xf32>
    tpu.vector_store %arg13[%c0_23, %c0_24], %39 {strides = array<i32>} : memref<8x128xf32, #tpu.memory_space<vmem>>, vector<8x128xf32>,
    %c0_25 = arith.constant 0 : index
    %c0_26 = arith.constant 0 : index
    %41 = vector.load %arg11[%c0_25, %c0_26] : memref<8x1xf32, #tpu.memory_space<vmem>>, vector<8x1xf32>
    tpu.vector_store %arg11[%c0_25, %c0_26], %23 {strides = array<i32>} : memref<8x1xf32, #tpu.memory_space<vmem>>, vector<8x1xf32>,
    %c0_i32_27 = arith.constant 0 : i32
    %42 = arith.cmpi eq, %arg2, %c0_i32_27 : i32
    %43 = arith.extui %42 : i1 to i32
    %c0_i32_28 = arith.constant 0 : i32
    %44 = arith.cmpi ne, %43, %c0_i32_28 : i32
    scf.if %44 {
      %c0_29 = arith.constant 0 : index
      %c0_30 = arith.constant 0 : index
      %45 = vector.load %arg12[%c0_29, %c0_30] : memref<8x1xf32, #tpu.memory_space<vmem>>, vector<8x1xf32>
      %46 = tpu.reciprocal %45 {approx = true} : vector<8x1xf32> -> vector<8x1xf32>
      %c0_31 = arith.constant 0 : index
      %c0_32 = arith.constant 0 : index
      %47 = vector.load %arg13[%c0_31, %c0_32] : memref<8x128xf32, #tpu.memory_space<vmem>>, vector<8x128xf32>
      %48 = vector.broadcast %46 : vector<8x1xf32> to vector<8x128xf32>
      %49 = arith.mulf %47, %48 : vector<8x128xf32>
      %c0_33 = arith.constant 0 : index
      %c0_34 = arith.constant 0 : index
      %c0_35 = arith.constant 0 : index
      %50 = vector.load %arg9[%c0_33, %c0_34, %c0_35] : memref<1x8x128xf32, #tpu.memory_space<vmem>>, vector<1x8x128xf32>
      %51 = vector.shape_cast %50 : vector<1x8x128xf32> to vector<8x128xf32>
      %52 = vector.shape_cast %49 : vector<8x128xf32> to vector<1x8x128xf32>
      tpu.vector_store %arg9[%c0_33, %c0_34, %c0_35], %52 {strides = array<i32>} : memref<1x8x128xf32, #tpu.memory_space<vmem>>, vector<1x8x128xf32>,
    } else {
    }
    return
  }
  func.func @transform_0(%arg0: i32, %arg1: i32, %arg2: i32) -> (i32, i32, i32) {
    %c0_i32 = arith.constant 0 : i32
    %c0_i32_0 = arith.constant 0 : i32
    return %arg0, %arg1, %c0_i32 : i32, i32, i32
  }
  func.func @transform_1(%arg0: i32, %arg1: i32, %arg2: i32) -> (i32, i32, i32) {
    %c0_i32 = arith.constant 0 : i32
    %c0_i32_0 = arith.constant 0 : i32
    return %arg0, %arg2, %c0_i32 : i32, i32, i32
  }
  func.func @transform_2(%arg0: i32, %arg1: i32, %arg2: i32) -> (i32, i32) {
    %c0_i32 = arith.constant 0 : i32
    %c0_i32_0 = arith.constant 0 : i32
    %c0_i32_1 = arith.constant 0 : i32
    return %c0_i32, %c0_i32_0 : i32, i32
  }
  func.func @transform_3(%arg0: i32, %arg1: i32, %arg2: i32) -> (i32, i32) {
    %c0_i32 = arith.constant 0 : i32
    %c0_i32_0 = arith.constant 0 : i32
    %c0_i32_1 = arith.constant 0 : i32
    return %c0_i32, %c0_i32_0 : i32, i32
  }
  func.func @transform_4(%arg0: i32, %arg1: i32, %arg2: i32) -> (i32, i32) {
    %c0_i32 = arith.constant 0 : i32
    %c0_i32_0 = arith.constant 0 : i32
    %c0_i32_1 = arith.constant 0 : i32
    return %c0_i32, %c0_i32_0 : i32, i32
  }
  func.func @transform_5(%arg0: i32, %arg1: i32, %arg2: i32) -> (i32, i32) {
    %c0_i32 = arith.constant 0 : i32
    %c0_i32_0 = arith.constant 0 : i32
    %c0_i32_1 = arith.constant 0 : i32
    return %c0_i32, %c0_i32_0 : i32, i32
  }
  func.func @transform_6(%arg0: i32, %arg1: i32, %arg2: i32) -> (i32, i32, i32) {
    %c0_i32 = arith.constant 0 : i32
    %c0_i32_0 = arith.constant 0 : i32
    return %arg0, %arg1, %c0_i32 : i32, i32, i32
  }
}

</mosaic_0001>

<llo_original>
// kernel: tpu_custom_call.1
$region0: #{tpu_custom_call.1}
  #allocation0 [shape = 'u32[]', space=smem, size = 0x4, offset = 0x4, fixed_abs, tag = 'smem constant byte address 0x4 - core index']
  #allocation1 [shape = 'u32[144,128]{1,0:T(1,128)}', space=vmem, size = 0x12000, scoped, tag = 'internal scratch']
  #allocation2 [shape = 'f32[8,128]{1,0:T(8,128)}', space=vmem, size = 0x1000, scoped, tag = 'scratch operand']
  #allocation3 [shape = 'f32[8,1]{1,0:T(8,128)}', space=vmem, size = 0x1000, scoped, tag = 'scratch operand']
  #allocation4 [shape = 'f32[8,1]{1,0:T(8,128)}', space=vmem, size = 0x1000, scoped, tag = 'scratch operand']
  #allocation5 [shape = 'f32[8,128]{1,0:T(8,128)}', space=vmem, size = 0x1000, scoped, tag = 'scratch operand']
  %s0 = inlined_call_operand.hbm [shape: f32[2,8,128], index: 0, kind: input, shape index: {}]
  %s1 = inlined_call_operand.hbm [shape: f32[2,8,128], index: 1, kind: input, shape index: {}]
  %s2 = inlined_call_operand.hbm [shape: f32[128,128], index: 2, kind: input, shape index: {}]
  %s3 = inlined_call_operand.hbm [shape: f32[128,128], index: 3, kind: input, shape index: {}]
  %s4 = inlined_call_operand.vmem [shape: f32[1,128], index: 4, kind: input, shape index: {}]
  %s5 = inlined_call_operand.vmem [shape: f32[1,128], index: 5, kind: input, shape index: {}]
  %s6 = inlined_call_operand.hbm [shape: f32[2,8,128], index: 6, kind: output, shape index: {}]
  %s7 = sld [smem:[#allocation0]]
  $region81: #{tpu_custom_call.1} parent=0
    _
  %s9 = ssub.s32 1, %s7
  %s10 = scalar_select 0, %s9, %s7
  $region1: #{tpu_custom_call.1} parent=0
    #allocation6 [shape = 'u8[8192]{0}', space=vmem, size = 0x2000, scoped, tag = 'input window, operand 0']
    #allocation7 [shape = 's32[2]{0}', space=sflag, size = 0x8, scoped, tag = 'scoped memory for tpu_custom_call.1']
    #allocation8 [shape = 's32[2]{0}', space=sflag, size = 0x8, scoped, tag = 'scoped memory for tpu_custom_call.1']
    #allocation9 [shape = 'u8[8192]{0}', space=vmem, size = 0x2000, scoped, tag = 'input window, operand 1']
    #allocation10 [shape = 's32[2]{0}', space=sflag, size = 0x8, scoped, tag = 'scoped memory for tpu_custom_call.1']
    #allocation11 [shape = 'u8[65536]{0}', space=vmem, size = 0x10000, scoped, tag = 'input window, operand 2, single buffered']
    #allocation12 [shape = 'u8[65536]{0}', space=vmem, size = 0x10000, scoped, tag = 'input window, operand 3, single buffered']
    #allocation13 [shape = 's32[1]{0}', space=sflag, size = 0x4, scoped, tag = 'scoped memory for tpu_custom_call.1']
    #allocation14 [shape = 'u8[8192]{0}', space=vmem, size = 0x2000, scoped, tag = 'output window, operand 0']
    %11 = vsyncpa [#allocation7], 0
    %s12 = scalar_lea.sflag [#allocation7], 1
    %13 = vsyncpa %s12, 0
    %14 = vsyncpa [#allocation10], 0
    %s15 = scalar_lea.sflag [#allocation10], 1
    %16 = vsyncpa %s15, 0
    %17 = vsyncpa [#allocation13], 0
    %18 = vsyncpa [#allocation8], 0
    %s19 = scalar_lea.sflag [#allocation8], 1
    %20 = vsyncpa %s19, 0
    loop: start=0, step=1, limit=4
    $region2: #{tpu_custom_call.1} parent=1 // loop_pre_header
      _
    $region3: #{tpu_custom_call.1} parent=1 // loop_header
      %s22 = sphi 0, %s26
      %p23 = scmp.ge.s32.totalorder %s22, 4
      %s29 = sphi 0, %s48
      %s30 = sphi 0, %s44
      %s31 = sphi 0, %s40
      %s32 = sphi 0, %s29
      %s33 = sphi 0, %s30
      %s34 = sphi 0, %s31
      %s35 = sphi 0, %s32
      %s36 = sphi 0, %s33
      %s37 = sphi 0, %s34
      %s53 = sphi 0, %s55
      %s56 = sphi 0, %s53
      %s57 = sphi 0, %s56
      %s73 = sphi 0, %s57
      %s81 = sphi 0, %s83
      %s84 = sphi 0, %s81
      %s85 = sphi 0, %s84
      %s101 = sphi 0, %s85
      %s105 = sphi 0, %s105
      %s107 = sphi 0, %s105
      %s108 = sphi 0, %s107
      %s122 = sphi 0, %s108
      %s126 = sphi 0, %s126
      %s128 = sphi 0, %s126
      %s129 = sphi 0, %s128
      %s143 = sphi 0, %s129
      %s147 = sphi 0, %s147
      %s149 = sphi 0, %s147
      %s150 = sphi 0, %s149
      %s164 = sphi 0, %s150
      %s168 = sphi 0, %s168
      %s170 = sphi 0, %s168
      %s171 = sphi 0, %s170
      %s185 = sphi 0, %s171
      %s193 = sphi 0, %s195
      %s196 = sphi 0, %s193
      %s197 = sphi 0, %s196
      %s213 = sphi 0, %s197
    $region4: #{tpu_custom_call.1} parent=1 // loop_header_branch
      %25 = sbr.rel (%p23) target = $region8
    $region5: #{tpu_custom_call.1} parent=1 // loop_body
      %s27 = ssub.s32 %s22, 1
      %s28 = ssub.s32 %s22, 2
      %s38 = sadd.s32 1, %s31
      %p39 = scmp.ge.s32.totalorder %s38, 1
      %s40 = scalar_select %p39, 0, %s38
      %s41 = sadd.s32 1, %s30
      %s42 = scalar_select %p39, %s41, %s30
      %p43 = scmp.ge.s32.totalorder %s42, 1
      %s44 = scalar_select %p43, 0, %s42
      %s45 = sadd.s32 1, %s29
      %s46 = scalar_select %p43, %s45, %s29
      %p47 = scmp.ge.s32.totalorder %s46, 2
      %s48 = scalar_select %p47, 0, %s46
      %s49 = ssub.s32 %s29, %s48
      %s50 = ssub.s32 %s30, %s44
      %s51 = sor.u32 %s49, %s50
      %p52 = scmp.eq.s32.totalorder %s51, 0
      %s54 = sadd.s32 %s53, 1
      %s55 = scalar_select %p52, %s53, %s54
      %p58 = pneg %p52
      %p59 = scmp.eq.s32.totalorder %s22, 1
      %p60 = por %p58, %p59
      %p61 = scmp.ne.s32.totalorder %s53, %s56
      %p62 = scmp.eq.s32.totalorder %s22, 0
      %p63 = por %p61, %p62
      %p64 = scmp.ne.s32.totalorder %s53, %s56
      %p65 = scmp.eq.s32.totalorder %s27, 1
      %p66 = por %p64, %p65
      %p67 = scmp.ne.s32.totalorder %s56, %s57
      %p68 = scmp.eq.s32.totalorder %s27, 0
      %p69 = por %p67, %p68
      %p70 = scmp.ne.s32.totalorder %s56, %s57
      %p71 = scmp.eq.s32.totalorder %s28, 1
      %p72 = por %p70, %p71
      %p74 = scmp.ne.s32.totalorder %s57, %s73
      %p75 = scmp.eq.s32.totalorder %s28, 0
      %p76 = por %p74, %p75
      %s77 = ssub.s32 %s29, %s48
      %s78 = ssub.s32 %s31, %s40
      %s79 = sor.u32 %s77, %s78
      %p80 = scmp.eq.s32.totalorder %s79, 0
      %s82 = sadd.s32 %s81, 1
      %s83 = scalar_select %p80, %s81, %s82
      %p86 = pneg %p80
      %p87 = scmp.eq.s32.totalorder %s22, 1
      %p88 = por %p86, %p87
      %p89 = scmp.ne.s32.totalorder %s81, %s84
      %p90 = scmp.eq.s32.totalorder %s22, 0
      %p91 = por %p89, %p90
      %p92 = scmp.ne.s32.totalorder %s81, %s84
      %p93 = scmp.eq.s32.totalorder %s27, 1
      %p94 = por %p92, %p93
      %p95 = scmp.ne.s32.totalorder %s84, %s85
      %p96 = scmp.eq.s32.totalorder %s27, 0
      %p97 = por %p95, %p96
      %p98 = scmp.ne.s32.totalorder %s84, %s85
      %p99 = scmp.eq.s32.totalorder %s28, 1
      %p100 = por %p98, %p99
      %p102 = scmp.ne.s32.totalorder %s85, %s101
      %p103 = scmp.eq.s32.totalorder %s28, 0
      %p104 = por %p102, %p103
      %s106 = sadd.s32 %s105, 1
      %p109 = scmp.eq.s32.totalorder %s22, 1
      %p110 = scmp.ne.s32.totalorder %s105, %s107
      %p111 = scmp.eq.s32.totalorder %s22, 0
      %p112 = por %p110, %p111
      %p113 = scmp.ne.s32.totalorder %s105, %s107
      %p114 = scmp.eq.s32.totalorder %s27, 1
      %p115 = por %p113, %p114
      %p116 = scmp.ne.s32.totalorder %s107, %s108
      %p117 = scmp.eq.s32.totalorder %s27, 0
      %p118 = por %p116, %p117
      %p119 = scmp.ne.s32.totalorder %s107, %s108
      %p120 = scmp.eq.s32.totalorder %s28, 1
      %p121 = por %p119, %p120
      %p123 = scmp.ne.s32.totalorder %s108, %s122
      %p124 = scmp.eq.s32.totalorder %s28, 0
      %p125 = por %p123, %p124
      %s127 = sadd.s32 %s126, 1
      %p130 = scmp.eq.s32.totalorder %s22, 1
      %p131 = scmp.ne.s32.totalorder %s126, %s128
      %p132 = scmp.eq.s32.totalorder %s22, 0
      %p133 = por %p131, %p132
      %p134 = scmp.ne.s32.totalorder %s126, %s128
      %p135 = scmp.eq.s32.totalorder %s27, 1
      %p136 = por %p134, %p135
      %p137 = scmp.ne.s32.totalorder %s128, %s129
      %p138 = scmp.eq.s32.totalorder %s27, 0
      %p139 = por %p137, %p138
      %p140 = scmp.ne.s32.totalorder %s128, %s129
      %p141 = scmp.eq.s32.totalorder %s28, 1
      %p142 = por %p140, %p141
      %p144 = scmp.ne.s32.totalorder %s129, %s143
      %p145 = scmp.eq.s32.totalorder %s28, 0
      %p146 = por %p144, %p145
      %s148 = sadd.s32 %s147, 1
      %p151 = scmp.eq.s32.totalorder %s22, 1
      %p152 = scmp.ne.s32.totalorder %s147, %s149
      %p153 = scmp.eq.s32.totalorder %s22, 0
      %p154 = por %p152, %p153
      %p155 = scmp.ne.s32.totalorder %s147, %s149
      %p156 = scmp.eq.s32.totalorder %s27, 1
      %p157 = por %p155, %p156
      %p158 = scmp.ne.s32.totalorder %s149, %s150
      %p159 = scmp.eq.s32.totalorder %s27, 0
      %p160 = por %p158, %p159
      %p161 = scmp.ne.s32.totalorder %s149, %s150
      %p162 = scmp.eq.s32.totalorder %s28, 1
      %p163 = por %p161, %p162
      %p165 = scmp.ne.s32.totalorder %s150, %s164
      %p166 = scmp.eq.s32.totalorder %s28, 0
      %p167 = por %p165, %p166
      %s169 = sadd.s32 %s168, 1
      %p172 = scmp.eq.s32.totalorder %s22, 1
      %p173 = scmp.ne.s32.totalorder %s168, %s170
      %p174 = scmp.eq.s32.totalorder %s22, 0
      %p175 = por %p173, %p174
      %p176 = scmp.ne.s32.totalorder %s168, %s170
      %p177 = scmp.eq.s32.totalorder %s27, 1
      %p178 = por %p176, %p177
      %p179 = scmp.ne.s32.totalorder %s170, %s171
      %p180 = scmp.eq.s32.totalorder %s27, 0
      %p181 = por %p179, %p180
      %p182 = scmp.ne.s32.totalorder %s170, %s171
      %p183 = scmp.eq.s32.totalorder %s28, 1
      %p184 = por %p182, %p183
      %p186 = scmp.ne.s32.totalorder %s171, %s185
      %p187 = scmp.eq.s32.totalorder %s28, 0
      %p188 = por %p186, %p187
      %s189 = ssub.s32 %s29, %s48
      %s190 = ssub.s32 %s30, %s44
      %s191 = sor.u32 %s189, %s190
      %p192 = scmp.eq.s32.totalorder %s191, 0
      %s194 = sadd.s32 %s193, 1
      %s195 = scalar_select %p192, %s193, %s194
      %p198 = pneg %p192
      %p199 = scmp.eq.s32.totalorder %s22, 1
      %p200 = por %p198, %p199
      %p201 = scmp.ne.s32.totalorder %s193, %s196
      %p202 = scmp.eq.s32.totalorder %s22, 0
      %p203 = por %p201, %p202
      %p204 = scmp.ne.s32.totalorder %s193, %s196
      %p205 = scmp.eq.s32.totalorder %s27, 1
      %p206 = por %p204, %p205
      %p207 = scmp.ne.s32.totalorder %s196, %s197
      %p208 = scmp.eq.s32.totalorder %s27, 0
      %p209 = por %p207, %p208
      %p210 = scmp.ne.s32.totalorder %s196, %s197
      %p211 = scmp.eq.s32.totalorder %s28, 1
      %p212 = por %p210, %p211
      %p214 = scmp.ne.s32.totalorder %s197, %s213
      %p215 = scmp.eq.s32.totalorder %s28, 0
      %p216 = por %p214, %p215
      %p217 = scmp.le.s32.totalorder 1, %s22
      %p218 = scmp.lt.s32.totalorder %s22, 3
      %p219 = pnand %p217, %p218
      %p220 = pneg %p219
      // Predicated region
      $region9: #{tpu_custom_call.1} parent=5 // pred_check
        _
      $region10: #{tpu_custom_call.1} parent=5 // pred_check_branch
        %222 = sbr.rel (%p219) target = $region12
      $region11: #{tpu_custom_call.1} parent=5 // pred_region
        %s223 = ssub.s32 %s22, 1
        // Predicated region
        $region13: #{tpu_custom_call.1} parent=11 // pred_check
          %p224 = pneg %p118
        $region14: #{tpu_custom_call.1} parent=11 // pred_check_branch
          %226 = sbr.rel (%p224) target = $region16
        $region15: #{tpu_custom_call.1} parent=11 // pred_region
          %s228 = ssub.s32 2048, 2048
          %229 = vsyncadd [#allocation10], %s228
          %s230 = sshll.u32 [#allocation11], 4
          %s231 = int_to_ptr.vmem [resolvable:$true] %s230
          %236 = dma.hbm_to_vmem [thread:$0]  %s2, 2048, %s231, [#allocation10], 128, 128, 8
        $region16: #{tpu_custom_call.1} parent=11 // pred_fallthru
          _
        // Predicated region
        $region17: #{tpu_custom_call.1} parent=11 // pred_check
          %p237 = pneg %p139
        $region18: #{tpu_custom_call.1} parent=11 // pred_check_branch
          %239 = sbr.rel (%p237) target = $region20
        $region19: #{tpu_custom_call.1} parent=11 // pred_region
          %s241 = ssub.s32 2048, 2048
          %242 = vsyncadd [#allocation13], %s241
          %s243 = sshll.u32 [#allocation12], 4
          %s244 = int_to_ptr.vmem [resolvable:$true] %s243
          %249 = dma.hbm_to_vmem [thread:$0]  %s3, 2048, %s244, [#allocation13], 128, 128, 8
        $region20: #{tpu_custom_call.1} parent=11 // pred_fallthru
          _
        // Predicated region
        $region21: #{tpu_custom_call.1} parent=11 // pred_check
          %p250 = pneg %p160
        $region22: #{tpu_custom_call.1} parent=11 // pred_check_branch
          %252 = sbr.rel (%p250) target = $region24
        $region23: #{tpu_custom_call.1} parent=11 // pred_region
          _
        $region24: #{tpu_custom_call.1} parent=11 // pred_fallthru
          _
        // Predicated region
        $region25: #{tpu_custom_call.1} parent=11 // pred_check
          %p253 = pneg %p181
        $region26: #{tpu_custom_call.1} parent=11 // pred_check_branch
          %255 = sbr.rel (%p253) target = $region28
        $region27: #{tpu_custom_call.1} parent=11 // pred_region
          _
        $region28: #{tpu_custom_call.1} parent=11 // pred_fallthru
          _
      $region12: #{tpu_custom_call.1} parent=5 // pred_fallthru
        _
      %p256 = scmp.lt.s32.totalorder %s22, 2
      // Predicated region
      $region29: #{tpu_custom_call.1} parent=5 // pred_check
        %p257 = pneg %p256
      $region30: #{tpu_custom_call.1} parent=5 // pred_check_branch
        %259 = sbr.rel (%p257) target = $region32
      $region31: #{tpu_custom_call.1} parent=5 // pred_region
        // Predicated region
        $region33: #{tpu_custom_call.1} parent=31 // pred_check
          %p260 = pneg %p63
        $region34: #{tpu_custom_call.1} parent=31 // pred_check_branch
          %262 = sbr.rel (%p260) target = $region36
        $region35: #{tpu_custom_call.1} parent=31 // pred_region
          %s263 = sand.u32 %s53, 1
          %s264 = scalar_lea.sflag [#allocation7], %s263
          %s265 = sand.u32 %s53, 1
          %s266 = smul.addr %s265, 8
          %s267 = scalar_lea.vmem [#allocation6], %s266
          %s269 = ssub.s32 128, 128
          %270 = vsyncadd %s264, %s269
          %s271 = sadd.s32 %s30, %s29
          %s272 = smul.addr %s271, 128
          %s273 = scalar_lea.hbm %s0, %s272
          %s275 = sshll.u32 %s267, 4
          %s276 = int_to_ptr.vmem [resolvable:$true] %s275
          %278 = dma.hbm_to_vmem [thread:$0]  %s273, 128, %s276, %s264
        $region36: #{tpu_custom_call.1} parent=31 // pred_fallthru
          _
        // Predicated region
        $region37: #{tpu_custom_call.1} parent=31 // pred_check
          %p279 = pneg %p91
        $region38: #{tpu_custom_call.1} parent=31 // pred_check_branch
          %281 = sbr.rel (%p279) target = $region40
        $region39: #{tpu_custom_call.1} parent=31 // pred_region
          %s282 = sand.u32 %s22, 1
          %s283 = scalar_lea.sflag [#allocation10], %s282
          %s284 = sand.u32 %s81, 1
          %s285 = smul.addr %s284, 8
          %s286 = scalar_lea.vmem [#allocation9], %s285
          %s288 = ssub.s32 128, 128
          %289 = vsyncadd %s283, %s288
          %s290 = sadd.s32 %s31, %s29
          %s291 = smul.addr %s290, 128
          %s292 = scalar_lea.hbm %s1, %s291
          %s294 = sshll.u32 %s286, 4
          %s295 = int_to_ptr.vmem [resolvable:$true] %s294
          %297 = dma.hbm_to_vmem [thread:$0]  %s292, 128, %s295, %s283
        $region40: #{tpu_custom_call.1} parent=31 // pred_fallthru
          _
      $region32: #{tpu_custom_call.1} parent=5 // pred_fallthru
        _
      %p298 = scmp.le.s32.totalorder 1, %s22
      %p299 = scmp.lt.s32.totalorder %s22, 3
      %p300 = pnand %p298, %p299
      %p301 = pneg %p300
      // Predicated region
      $region41: #{tpu_custom_call.1} parent=5 // pred_check
        _
      $region42: #{tpu_custom_call.1} parent=5 // pred_check_branch
        %303 = sbr.rel (%p300) target = $region44
      $region43: #{tpu_custom_call.1} parent=5 // pred_region
        %s304 = ssub.s32 %s22, 1
        %s305 = sand.u32 %s56, 1
        %s306 = scalar_lea.sflag [#allocation7], %s305
        %s307 = sand.u32 %s56, 1
        %s308 = smul.addr %s307, 8
        %s309 = scalar_lea.vmem [#allocation6], %s308
        // Predicated region
        $region45: #{tpu_custom_call.1} parent=43 // pred_check
          %p310 = pneg %p69
        $region46: #{tpu_custom_call.1} parent=43 // pred_check_branch
          %312 = sbr.rel (%p310) target = $region48
        $region47: #{tpu_custom_call.1} parent=43 // pred_region
          %313 = dma.done %s306, 128
        $region48: #{tpu_custom_call.1} parent=43 // pred_fallthru
          _
        %s314 = sand.u32 %s27, 1
        %s315 = scalar_lea.sflag [#allocation10], %s314
        %s316 = sand.u32 %s84, 1
        %s317 = smul.addr %s316, 8
        %s318 = scalar_lea.vmem [#allocation9], %s317
        // Predicated region
        $region49: #{tpu_custom_call.1} parent=43 // pred_check
          %p319 = pneg %p97
        $region50: #{tpu_custom_call.1} parent=43 // pred_check_branch
          %321 = sbr.rel (%p319) target = $region52
        $region51: #{tpu_custom_call.1} parent=43 // pred_region
          %322 = dma.done %s315, 128
        $region52: #{tpu_custom_call.1} parent=43 // pred_fallthru
          _
        // Predicated region
        $region53: #{tpu_custom_call.1} parent=43 // pred_check
          %p323 = pneg %p118
        $region54: #{tpu_custom_call.1} parent=43 // pred_check_branch
          %325 = sbr.rel (%p323) target = $region56
        $region55: #{tpu_custom_call.1} parent=43 // pred_region
          %326 = dma.done [#allocation10], 2048
        $region56: #{tpu_custom_call.1} parent=43 // pred_fallthru
          _
        // Predicated region
        $region57: #{tpu_custom_call.1} parent=43 // pred_check
          %p327 = pneg %p139
        $region58: #{tpu_custom_call.1} parent=43 // pred_check_branch
          %329 = sbr.rel (%p327) target = $region60
        $region59: #{tpu_custom_call.1} parent=43 // pred_region
          %330 = dma.done [#allocation13], 2048
        $region60: #{tpu_custom_call.1} parent=43 // pred_fallthru
          _
        %s331 = sand.u32 %s56, 1
        %s332 = scalar_lea.sflag [#allocation7], %s331
        %s333 = sand.u32 %s56, 1
        %s334 = smul.addr %s333, 8
        %s335 = scalar_lea.vmem [#allocation6], %s334
        %p336 = pneg %p69
        %p337 = pneg %p66
        %s338 = sand.u32 %s27, 1
        %s339 = scalar_lea.sflag [#allocation10], %s338
        %s340 = sand.u32 %s84, 1
        %s341 = smul.addr %s340, 8
        %s342 = scalar_lea.vmem [#allocation9], %s341
        %p343 = pneg %p97
        %p344 = pneg %p94
        %p345 = pneg %p118
        %p346 = pneg %p115
        %p347 = pneg %p139
        %p348 = pneg %p136
        %p349 = pneg %p160
        %p350 = pneg %p157
        %p351 = pneg %p181
        %p352 = pneg %p178
        %p353 = pneg %p209
        %p354 = pneg %p206
        %s355 = sand.u32 %s196, 1
        %s356 = scalar_lea.sflag [#allocation8], %s355
        %s357 = sand.u32 %s196, 1
        %s358 = smul.addr %s357, 8
        %s359 = scalar_lea.vmem [#allocation14], %s358
        %p360 = scmp.eq.s32.totalorder %s34, 0
        // Predicated region
        $region61: #{tpu_custom_call.1} parent=43 // pred_check
          %p361 = pneg %p360
        $region62: #{tpu_custom_call.1} parent=43 // pred_check_branch
          %363 = sbr.rel (%p361) target = $region64
        $region63: #{tpu_custom_call.1} parent=43 // pred_region
          %v364 = vld [vmem:[%s309] sm:$0xff]
          %v365 = vld [vmem:[#allocation11] sm:$0xff]
          %v366 = vld [vmem:[#allocation11 + $0x8] sm:$0xff]
          %v367 = vld [vmem:[#allocation11 + $0x10] sm:$0xff]
          %v368 = vld [vmem:[#allocation11 + $0x18] sm:$0xff]
          %v369 = vld [vmem:[#allocation11 + $0x20] sm:$0xff]
          %v370 = vld [vmem:[#allocation11 + $0x28] sm:$0xff]
          %v371 = vld [vmem:[#allocation11 + $0x30] sm:$0xff]
          %v372 = vld [vmem:[#allocation11 + $0x38] sm:$0xff]
          %v373 = vld [vmem:[#allocation11 + $0x40] sm:$0xff]
          %v374 = vld [vmem:[#allocation11 + $0x48] sm:$0xff]
          %v375 = vld [vmem:[#allocation11 + $0x50] sm:$0xff]
          %v376 = vld [vmem:[#allocation11 + $0x58] sm:$0xff]
          %v377 = vld [vmem:[#allocation11 + $0x60] sm:$0xff]
          %v378 = vld [vmem:[#allocation11 + $0x68] sm:$0xff]
          %v379 = vld [vmem:[#allocation11 + $0x70] sm:$0xff]
          %v380 = vld [vmem:[#allocation11 + $0x78] sm:$0xff]
          %v381 = vld [vmem:[%s4] sm:$0x1]
          %v383 = vlaneseq
          %v384 = vshrl.u32 %v383, 7
          %v385 = vsub.s32 0, %v384
          %v386 = vrot.slane %v381, %v385
          %388 = vmatprep.subr.mxu0 0.0
          %389 = vmatpush1.msra.mxu0 %v365
          %390 = vmatprep.subr.mxu0 0.0
          %391 = vmatpush1.msra.mxu0 %v366
          %392 = vmatprep.subr.mxu0 0.0
          %393 = vmatpush1.msra.mxu0 %v367
          %394 = vmatprep.subr.mxu0 0.0
          %395 = vmatpush1.msra.mxu0 %v368
          %396 = vmatprep.subr.mxu0 0.0
          %397 = vmatpush1.msra.mxu0 %v369
          %398 = vmatprep.subr.mxu0 0.0
          %399 = vmatpush1.msra.mxu0 %v370
          %400 = vmatprep.subr.mxu0 0.0
          %401 = vmatpush1.msra.mxu0 %v371
          %402 = vmatprep.subr.mxu0 0.0
          %403 = vmatpush1.msra.mxu0 %v372
          %404 = vmatprep.subr.mxu0 0.0
          %405 = vmatpush1.msra.mxu0 %v373
          %406 = vmatprep.subr.mxu0 0.0
          %407 = vmatpush1.msra.mxu0 %v374
          %408 = vmatprep.subr.mxu0 0.0
          %409 = vmatpush1.msra.mxu0 %v375
          %410 = vmatprep.subr.mxu0 0.0
          %411 = vmatpush1.msra.mxu0 %v376
          %412 = vmatprep.subr.mxu0 0.0
          %413 = vmatpush1.msra.mxu0 %v377
          %414 = vmatprep.subr.mxu0 0.0
          %415 = vmatpush1.msra.mxu0 %v378
          %416 = vmatprep.subr.mxu0 0.0
          %417 = vmatpush1.msra.mxu0 %v379
          %418 = vmatprep.subr.mxu0 0.0
          %419 = vmatpush1.msra.mxu0 %v380
          %420 = vmatprep.subr.mxu0 0.0
          %421 = vmatpush1.msra.mxu0 0.0
          %422 = vmatprep.subr.mxu0 0.0
          %423 = vmatpush1.msra.mxu0 0.0
          %424 = vmatprep.subr.mxu0 0.0
          %425 = vmatpush1.msra.mxu0 0.0
          %426 = vmatprep.subr.mxu0 0.0
          %427 = vmatpush1.msra.mxu0 0.0
          %428 = vmatprep.subr.mxu0 0.0
          %429 = vmatpush1.msra.mxu0 0.0
          %430 = vmatprep.subr.mxu0 0.0
          %431 = vmatpush1.msra.mxu0 0.0
          %432 = vmatprep.subr.mxu0 0.0
          %433 = vmatpush1.msra.mxu0 0.0
          %434 = vmatprep.subr.mxu0 0.0
          %435 = vmatpush1.msra.mxu0 0.0
          %436 = vmatprep.subr.mxu0 0.0
          %437 = vmatpush1.msra.mxu0 0.0
          %438 = vmatprep.subr.mxu0 0.0
          %439 = vmatpush1.msra.mxu0 0.0
          %440 = vmatprep.subr.mxu0 0.0
          %441 = vmatpush1.msra.mxu0 0.0
          %442 = vmatprep.subr.mxu0 0.0
          %443 = vmatpush1.msra.mxu0 0.0
          %444 = vmatprep.subr.mxu0 0.0
          %445 = vmatpush1.msra.mxu0 0.0
          %446 = vmatprep.subr.mxu0 0.0
          %447 = vmatpush1.msra.mxu0 0.0
          %448 = vmatprep.subr.mxu0 0.0
          %449 = vmatpush1.msra.mxu0 0.0
          %450 = vmatprep.subr.mxu0 0.0
          %451 = vmatpush1.msra.mxu0 0.0
          %452 = vmatprep.mubr.f32.mxu0 0.0
          %453 = vmatmul.mubr.f32.gmra.mrb[0].mxu0 %v364
          %v454 = vpop.f32.mrb[0].mxu0
          %v455 = vadd.f32 %v386, %v454
          %v456 = vpop.f32.mrb[0].mxu0
          %457 = vdwg.mxu0
          %v458 = vmul.f32 %v455, 0.25
          %459 = vst [vmem:[#allocation2] sm:$0xff] %v458
          %vm460 = vcmask 7168
          %461 = vst.msk [vmem:[#allocation3] sm:$0xff] %vm460, -inf
          %462 = vst.msk [vmem:[#allocation4] sm:$0xff] %vm460, 0.0
          %463 = vst [vmem:[#allocation5] sm:$0xff] 0.0
        $region64: #{tpu_custom_call.1} parent=43 // pred_fallthru
          _
        %v464 = vld [vmem:[%s318] sm:$0xff]
        %v465 = vld [vmem:[#allocation12] sm:$0xff]
        %v466 = vld [vmem:[#allocation12 + $0x8] sm:$0xff]
        %v467 = vld [vmem:[#allocation12 + $0x10] sm:$0xff]
        %v468 = vld [vmem:[#allocation12 + $0x18] sm:$0xff]
        %v469 = vld [vmem:[#allocation12 + $0x20] sm:$0xff]
        %v470 = vld [vmem:[#allocation12 + $0x28] sm:$0xff]
        %v471 = vld [vmem:[#allocation12 + $0x30] sm:$0xff]
        %v472 = vld [vmem:[#allocation12 + $0x38] sm:$0xff]
        %v473 = vld [vmem:[#allocation12 + $0x40] sm:$0xff]
        %v474 = vld [vmem:[#allocation12 + $0x48] sm:$0xff]
        %v475 = vld [vmem:[#allocation12 + $0x50] sm:$0xff]
        %v476 = vld [vmem:[#allocation12 + $0x58] sm:$0xff]
        %v477 = vld [vmem:[#allocation12 + $0x60] sm:$0xff]
        %v478 = vld [vmem:[#allocation12 + $0x68] sm:$0xff]
        %v479 = vld [vmem:[#allocation12 + $0x70] sm:$0xff]
        %v480 = vld [vmem:[#allocation12 + $0x78] sm:$0xff]
        %v481 = vld [vmem:[%s5] sm:$0x1]
        %v483 = vlaneseq
        %v484 = vshrl.u32 %v483, 7
        %v485 = vsub.s32 0, %v484
        %v486 = vrot.slane %v481, %v485
        %488 = vmatprep.subr.mxu0 0.0
        %489 = vmatpush1.msra.mxu0 %v465
        %490 = vmatprep.subr.mxu0 0.0
        %491 = vmatpush1.msra.mxu0 %v466
        %492 = vmatprep.subr.mxu0 0.0
        %493 = vmatpush1.msra.mxu0 %v467
        %494 = vmatprep.subr.mxu0 0.0
        %495 = vmatpush1.msra.mxu0 %v468
        %496 = vmatprep.subr.mxu0 0.0
        %497 = vmatpush1.msra.mxu0 %v469
        %498 = vmatprep.subr.mxu0 0.0
        %499 = vmatpush1.msra.mxu0 %v470
        %500 = vmatprep.subr.mxu0 0.0
        %501 = vmatpush1.msra.mxu0 %v471
        %502 = vmatprep.subr.mxu0 0.0
        %503 = vmatpush1.msra.mxu0 %v472
        %504 = vmatprep.subr.mxu0 0.0
        %505 = vmatpush1.msra.mxu0 %v473
        %506 = vmatprep.subr.mxu0 0.0
        %507 = vmatpush1.msra.mxu0 %v474
        %508 = vmatprep.subr.mxu0 0.0
        %509 = vmatpush1.msra.mxu0 %v475
        %510 = vmatprep.subr.mxu0 0.0
        %511 = vmatpush1.msra.mxu0 %v476
        %512 = vmatprep.subr.mxu0 0.0
        %513 = vmatpush1.msra.mxu0 %v477
        %514 = vmatprep.subr.mxu0 0.0
        %515 = vmatpush1.msra.mxu0 %v478
        %516 = vmatprep.subr.mxu0 0.0
        %517 = vmatpush1.msra.mxu0 %v479
        %518 = vmatprep.subr.mxu0 0.0
        %519 = vmatpush1.msra.mxu0 %v480
        %520 = vmatprep.subr.mxu0 0.0
        %521 = vmatpush1.msra.mxu0 0.0
        %522 = vmatprep.subr.mxu0 0.0
        %523 = vmatpush1.msra.mxu0 0.0
        %524 = vmatprep.subr.mxu0 0.0
        %525 = vmatpush1.msra.mxu0 0.0
        %526 = vmatprep.subr.mxu0 0.0
        %527 = vmatpush1.msra.mxu0 0.0
        %528 = vmatprep.subr.mxu0 0.0
        %529 = vmatpush1.msra.mxu0 0.0
        %530 = vmatprep.subr.mxu0 0.0
        %531 = vmatpush1.msra.mxu0 0.0
        %532 = vmatprep.subr.mxu0 0.0
        %533 = vmatpush1.msra.mxu0 0.0
        %534 = vmatprep.subr.mxu0 0.0
        %535 = vmatpush1.msra.mxu0 0.0
        %536 = vmatprep.subr.mxu0 0.0
        %537 = vmatpush1.msra.mxu0 0.0
        %538 = vmatprep.subr.mxu0 0.0
        %539 = vmatpush1.msra.mxu0 0.0
        %540 = vmatprep.subr.mxu0 0.0
        %541 = vmatpush1.msra.mxu0 0.0
        %542 = vmatprep.subr.mxu0 0.0
        %543 = vmatpush1.msra.mxu0 0.0
        %544 = vmatprep.subr.mxu0 0.0
        %545 = vmatpush1.msra.mxu0 0.0
        %546 = vmatprep.subr.mxu0 0.0
        %547 = vmatpush1.msra.mxu0 0.0
        %548 = vmatprep.subr.mxu0 0.0
        %549 = vmatpush1.msra.mxu0 0.0
        %550 = vmatprep.subr.mxu0 0.0
        %551 = vmatpush1.msra.mxu0 0.0
        %552 = vmatprep.mubr.f32.mxu0 0.0
        %553 = vmatmul.mubr.f32.gmra.mrb[0].mxu0 %v464
        %v554 = vpop.f32.mrb[0].mxu0
        %v555 = vadd.f32 %v486, %v554
        %v556 = vpop.f32.mrb[0].mxu0
        %557 = vdwg.mxu0
        %v558 = vld [vmem:[#allocation2] sm:$0xff]
        %559 = vmatprep.subr.mxu0 0.0
        %560 = vmatpush1.xpose.msra.mxu0 %v555
        %561 = vmatprep.subr.mxu0 0.0
        %562 = vmatpush1.xpose.msra.mxu0 0.0
        %563 = vmatprep.subr.mxu0 0.0
        %564 = vmatpush1.xpose.msra.mxu0 0.0
        %565 = vmatprep.subr.mxu0 0.0
        %566 = vmatpush1.xpose.msra.mxu0 0.0
        %567 = vmatprep.subr.mxu0 0.0
        %568 = vmatpush1.xpose.msra.mxu0 0.0
        %569 = vmatprep.subr.mxu0 0.0
        %570 = vmatpush1.xpose.msra.mxu0 0.0
        %571 = vmatprep.subr.mxu0 0.0
        %572 = vmatpush1.xpose.msra.mxu0 0.0
        %573 = vmatprep.subr.mxu0 0.0
        %574 = vmatpush1.xpose.msra.mxu0 0.0
        %575 = vmatprep.subr.mxu0 0.0
        %576 = vmatpush1.xpose.msra.mxu0 0.0
        %577 = vmatprep.subr.mxu0 0.0
        %578 = vmatpush1.xpose.msra.mxu0 0.0
        %579 = vmatprep.subr.mxu0 0.0
        %580 = vmatpush1.xpose.msra.mxu0 0.0
        %581 = vmatprep.subr.mxu0 0.0
        %582 = vmatpush1.xpose.msra.mxu0 0.0
        %583 = vmatprep.subr.mxu0 0.0
        %584 = vmatpush1.xpose.msra.mxu0 0.0
        %585 = vmatprep.subr.mxu0 0.0
        %586 = vmatpush1.xpose.msra.mxu0 0.0
        %587 = vmatprep.subr.mxu0 0.0
        %588 = vmatpush1.xpose.msra.mxu0 0.0
        %589 = vmatprep.subr.mxu0 0.0
        %590 = vmatpush1.xpose.msra.mxu0 0.0
        %591 = vmatprep.subr.mxu0 0.0
        %592 = vmatpush1.xpose.msra.mxu0 0.0
        %593 = vmatprep.subr.mxu0 0.0
        %594 = vmatpush1.xpose.msra.mxu0 0.0
        %595 = vmatprep.subr.mxu0 0.0
        %596 = vmatpush1.xpose.msra.mxu0 0.0
        %597 = vmatprep.subr.mxu0 0.0
        %598 = vmatpush1.xpose.msra.mxu0 0.0
        %599 = vmatprep.subr.mxu0 0.0
        %600 = vmatpush1.xpose.msra.mxu0 0.0
        %601 = vmatprep.subr.mxu0 0.0
        %602 = vmatpush1.xpose.msra.mxu0 0.0
        %603 = vmatprep.subr.mxu0 0.0
        %604 = vmatpush1.xpose.msra.mxu0 0.0
        %605 = vmatprep.subr.mxu0 0.0
        %606 = vmatpush1.xpose.msra.mxu0 0.0
        %607 = vmatprep.subr.mxu0 0.0
        %608 = vmatpush1.xpose.msra.mxu0 0.0
        %609 = vmatprep.subr.mxu0 0.0
        %610 = vmatpush1.xpose.msra.mxu0 0.0
        %611 = vmatprep.subr.mxu0 0.0
        %612 = vmatpush1.xpose.msra.mxu0 0.0
        %613 = vmatprep.subr.mxu0 0.0
        %614 = vmatpush1.xpose.msra.mxu0 0.0
        %615 = vmatprep.subr.mxu0 0.0
        %616 = vmatpush1.xpose.msra.mxu0 0.0
        %617 = vmatprep.subr.mxu0 0.0
        %618 = vmatpush1.xpose.msra.mxu0 0.0
        %619 = vmatprep.subr.mxu0 0.0
        %620 = vmatpush1.xpose.msra.mxu0 0.0
        %621 = vmatprep.subr.mxu0 0.0
        %622 = vmatpush1.xpose.msra.mxu0 0.0
        %623 = vmatprep.mubr.f32.mxu0 0.0
        %624 = vmatmul.mubr.f32.gmra.mrb[0].mxu0 %v558
        %v625 = vpop.f32.mrb[0].mxu0
        %v626 = vadd.f32 0.0, %v625
        %v627 = vpop.f32.mrb[0].mxu0
        %628 = vdwg.mxu0
        %s629 = smul.u32 %s34, 8
        %v630 = vlaneseq
        %v631 = vand.u32 %v630, 127
        %v632 = vstv %s629
        %v633 = vadd.s32 %v632, %v631
        %vm634 = vcmp.lt.s32.totalorder %v633, 8
        %v635 = vsel %vm634, %v626, -1e+30
        %v636 = vld [vmem:[#allocation3] sm:$0xff]
        %vm637 = vcmask 64512
        %v638 = vsel %vm637, %v635, -inf
        %639 = vmax.xlane.f32.xlu0 %v638
        %v640 = vpop.xlane.xlu0 %639
        %v641 = vmax.f32 %v636, %v640
        %v642 = vsub.f32 %v636, %v641
        %v643 = vmul.f32 %v642, 1.442695
        %v644 = vpow.pop %v643
        %646 = vset.pattern.permute.xlu0 0
        %647 = vperm.xlu0 %646, %v641
        %v648 = vpop.permute.xlu0 %647
        %v650 = vsub.f32 %v635, %v648
        %v651 = vmul.f32 %v650, 1.442695
        %v652 = vpow.pop %v651
        %v653 = vld [vmem:[#allocation4] sm:$0xff]
        %v654 = vmul.f32 %v644, %v653
        %v655 = vsel %vm637, %v652, 0.0
        %656 = vadd.xlane.f32.xlu0 %v655
        %v657 = vpop.xlane.xlu0 %656
        %v658 = vadd.f32 %v654, %v657
        %vm659 = vcmask 7168
        %660 = vst.msk [vmem:[#allocation4] sm:$0xff] %vm659, %v658
        %v661 = vld [vmem:[#allocation5] sm:$0xff]
        %663 = vset.pattern.permute.xlu0 0
        %664 = vperm.xlu0 %663, %v644
        %v665 = vpop.permute.xlu0 %664
        %v667 = vmul.f32 %v665, %v661
        %v669 = vsel %vm637, %v652, 0
        %671 = vmatprep.subr.mxu0 0.0
        %672 = vmatpush1.msra.mxu0 %v464
        %673 = vmatprep.subr.mxu0 0.0
        %674 = vmatpush1.msra.mxu0 0.0
        %675 = vmatprep.subr.mxu0 0.0
        %676 = vmatpush1.msra.mxu0 0.0
        %677 = vmatprep.subr.mxu0 0.0
        %678 = vmatpush1.msra.mxu0 0.0
        %679 = vmatprep.subr.mxu0 0.0
        %680 = vmatpush1.msra.mxu0 0.0
        %681 = vmatprep.subr.mxu0 0.0
        %682 = vmatpush1.msra.mxu0 0.0
        %683 = vmatprep.subr.mxu0 0.0
        %684 = vmatpush1.msra.mxu0 0.0
        %685 = vmatprep.subr.mxu0 0.0
        %686 = vmatpush1.msra.mxu0 0.0
        %687 = vmatprep.subr.mxu0 0.0
        %688 = vmatpush1.msra.mxu0 0.0
        %689 = vmatprep.subr.mxu0 0.0
        %690 = vmatpush1.msra.mxu0 0.0
        %691 = vmatprep.subr.mxu0 0.0
        %692 = vmatpush1.msra.mxu0 0.0
        %693 = vmatprep.subr.mxu0 0.0
        %694 = vmatpush1.msra.mxu0 0.0
        %695 = vmatprep.subr.mxu0 0.0
        %696 = vmatpush1.msra.mxu0 0.0
        %697 = vmatprep.subr.mxu0 0.0
        %698 = vmatpush1.msra.mxu0 0.0
        %699 = vmatprep.subr.mxu0 0.0
        %700 = vmatpush1.msra.mxu0 0.0
        %701 = vmatprep.subr.mxu0 0.0
        %702 = vmatpush1.msra.mxu0 0.0
        %703 = vmatprep.subr.mxu0 0.0
        %704 = vmatpush1.msra.mxu0 0.0
        %705 = vmatprep.subr.mxu0 0.0
        %706 = vmatpush1.msra.mxu0 0.0
        %707 = vmatprep.subr.mxu0 0.0
        %708 = vmatpush1.msra.mxu0 0.0
        %709 = vmatprep.subr.mxu0 0.0
        %710 = vmatpush1.msra.mxu0 0.0
        %711 = vmatprep.subr.mxu0 0.0
        %712 = vmatpush1.msra.mxu0 0.0
        %713 = vmatprep.subr.mxu0 0.0
        %714 = vmatpush1.msra.mxu0 0.0
        %715 = vmatprep.subr.mxu0 0.0
        %716 = vmatpush1.msra.mxu0 0.0
        %717 = vmatprep.subr.mxu0 0.0
        %718 = vmatpush1.msra.mxu0 0.0
        %719 = vmatprep.subr.mxu0 0.0
        %720 = vmatpush1.msra.mxu0 0.0
        %721 = vmatprep.subr.mxu0 0.0
        %722 = vmatpush1.msra.mxu0 0.0
        %723 = vmatprep.subr.mxu0 0.0
        %724 = vmatpush1.msra.mxu0 0.0
        %725 = vmatprep.subr.mxu0 0.0
        %726 = vmatpush1.msra.mxu0 0.0
        %727 = vmatprep.subr.mxu0 0.0
        %728 = vmatpush1.msra.mxu0 0.0
        %729 = vmatprep.subr.mxu0 0.0
        %730 = vmatpush1.msra.mxu0 0.0
        %731 = vmatprep.subr.mxu0 0.0
        %732 = vmatpush1.msra.mxu0 0.0
        %733 = vmatprep.subr.mxu0 0.0
        %734 = vmatpush1.msra.mxu0 0.0
        %735 = vmatprep.mubr.f32.mxu0 0.0
        %736 = vmatmul.mubr.f32.gmra.mrb[0].mxu0 %v669
        %v737 = vpop.f32.mrb[0].mxu0
        %v738 = vadd.f32 0.0, %v737
        %v739 = vpop.f32.mrb[0].mxu0
        %740 = vdwg.mxu0
        %v741 = vadd.f32 %v667, %v738
        %742 = vst [vmem:[#allocation5] sm:$0xff] %v741
        %743 = vst.msk [vmem:[#allocation3] sm:$0xff] %vm659, %v641
        // Predicated region
        $region65: #{tpu_custom_call.1} parent=43 // pred_check
          %p744 = pneg %p360
        $region66: #{tpu_custom_call.1} parent=43 // pred_check_branch
          %746 = sbr.rel (%p744) target = $region68
        $region67: #{tpu_custom_call.1} parent=43 // pred_region
          %v747 = vld [vmem:[#allocation4] sm:$0xff]
          %v748 = vrcp.pop %v747
          %v749 = vld [vmem:[#allocation5] sm:$0xff]
          %751 = vset.pattern.permute.xlu0 0
          %752 = vperm.xlu0 %751, %v748
          %v753 = vpop.permute.xlu0 %752
          %v755 = vmul.f32 %v749, %v753
          %756 = vst [vmem:[%s359] sm:$0xff] %v755
        $region68: #{tpu_custom_call.1} parent=43 // pred_fallthru
          _
        %s757 = sand.u32 %s196, 1
        %s758 = scalar_lea.sflag [#allocation8], %s757
        %s759 = sand.u32 %s196, 1
        %s760 = smul.addr %s759, 8
        %s761 = scalar_lea.vmem [#allocation14], %s760
        // Predicated region
        $region69: #{tpu_custom_call.1} parent=43 // pred_check
          %p762 = pneg %p206
        $region70: #{tpu_custom_call.1} parent=43 // pred_check_branch
          %764 = sbr.rel (%p762) target = $region72
        $region71: #{tpu_custom_call.1} parent=43 // pred_region
          %s766 = ssub.s32 128, 128
          %767 = vsyncadd %s758, %s766
          %s768 = sadd.s32 %s33, %s32
          %s769 = smul.addr %s768, 128
          %s770 = scalar_lea.hbm %s6, %s769
          %s772 = sshll.u32 %s761, 4
          %s773 = int_to_ptr.vmem [resolvable:$true] %s772
          %775 = dma.vmem_to_hbm [thread:$0]  %s773, 128, %s770, %s758
        $region72: #{tpu_custom_call.1} parent=43 // pred_fallthru
          _
      $region44: #{tpu_custom_call.1} parent=5 // pred_fallthru
        _
      %p776 = scmp.le.s32.totalorder 2, %s22
      // Predicated region
      $region73: #{tpu_custom_call.1} parent=5 // pred_check
        %p777 = pneg %p776
      $region74: #{tpu_custom_call.1} parent=5 // pred_check_branch
        %779 = sbr.rel (%p777) target = $region76
      $region75: #{tpu_custom_call.1} parent=5 // pred_region
        %s780 = ssub.s32 %s22, 2
        // Predicated region
        $region77: #{tpu_custom_call.1} parent=75 // pred_check
          %p781 = pneg %p212
        $region78: #{tpu_custom_call.1} parent=75 // pred_check_branch
          %783 = sbr.rel (%p781) target = $region80
        $region79: #{tpu_custom_call.1} parent=75 // pred_region
          %s784 = sand.u32 %s197, 1
          %s785 = scalar_lea.sflag [#allocation8], %s784
          %s786 = sand.u32 %s197, 1
          %s787 = smul.addr %s786, 8
          %s788 = scalar_lea.vmem [#allocation14], %s787
          %789 = dma.done %s785, 128
        $region80: #{tpu_custom_call.1} parent=75 // pred_fallthru
          _
      $region76: #{tpu_custom_call.1} parent=5 // pred_fallthru
        _
    $region6: #{tpu_custom_call.1} parent=1 // loop_footer
      %s26 = sadd.s32 1, %s22
    $region7: #{tpu_custom_call.1} parent=1 // loop_footer_branch
      %21 = sbr.rel target = $region3
    $region8: #{tpu_custom_call.1} parent=1 // loop_exit
      _
    %790 = vsyncpa [#allocation7], 1
    %s791 = scalar_lea.sflag [#allocation7], 1
    %792 = vsyncpa %s791, 1
    %793 = vsyncpa [#allocation10], 1
    %s794 = scalar_lea.sflag [#allocation10], 1
    %795 = vsyncpa %s794, 1
    %796 = vsyncpa [#allocation13], 1
    %797 = vsyncpa [#allocation8], 1
    %s798 = scalar_lea.sflag [#allocation8], 1
    %799 = vsyncpa %s798, 1

</llo_original>
